<compile_context>
chip_gen: v5e
topology: v5e:2x2
jax: 0.10.0
libtpu: 0.0.40
codegen_flags: <defaults>
</compile_context>

<pallas_src>
import jax
import jax.numpy as jnp
from jax.experimental import pallas as pl
from jax.experimental.pallas import tpu as pltpu

EMB_DIM = 32                 # stand-in for settings.EMB_DIM
TRIPLET_LAYER_SIZE1 = 128
TRIPLET_LAYER_SIZE2 = 64
_NORM_EPS = 1e-12            # avoids 0/0 -> NaN for all-zero rows


def _round_up(n, m):
    return ((n + m - 1) // m) * m


def _triplet_mlp_kernel(x_ref, w1_ref, b1_ref, w2_ref, b2_ref, o_ref):
    # layer1: Linear + ReLU  (MXU matmul, f32 accumulation; bias/ReLU in f32)
    h = jnp.dot(x_ref[...], w1_ref[...], preferred_element_type=jnp.float32)
    h = jnp.maximum(h + b1_ref[...], 0.0)
    # layer2: Linear + ReLU  (feed MXU in the weights' compute dtype, width 64)
    o = jnp.dot(h.astype(w2_ref.dtype), w2_ref[...],
                preferred_element_type=jnp.float32)
    o = jnp.maximum(o + b2_ref[...], 0.0)
    # L2 normalize along dim=1 (keepdim).  rsqrt runs on the EUP slot.
    sumsq = jnp.sum(o * o, axis=1, keepdims=True)
    inv = jax.lax.rsqrt(sumsq + _NORM_EPS)
    o_ref[...] = (o * inv).astype(o_ref.dtype)


def triplet_forward(x, w1, b1, w2, b2, *,
                    block_rows=2048,
                    compute_dtype=jnp.bfloat16,
                    out_dtype=jnp.bfloat16):
    """Forward pass of NeuralNet.  Intended for large-batch streaming inference;
    for genuinely tiny batches plain XLA fusion is just as good."""
    B, emb = x.shape
    n1 = w1.shape[1]                      # 128
    n2 = w2.shape[1]                      # 64

    # Cast matmul operands (halves x's HBM traffic when bf16); biases stay f32.
    xc = x.astype(compute_dtype)
    w1c = w1.astype(compute_dtype)
    w2c = w2.astype(compute_dtype)
    b1f = b1.astype(jnp.float32).reshape(1, n1)
    b2f = b2.astype(jnp.float32).reshape(1, n2)

    # Batch row-block: multiple of 16 (bf16 sublane packing; also fine for f32),
    # capped at block_rows.  Ragged last block is handled by masked writeback.
    tb = min(block_rows, _round_up(B, 16))
    grid = (pl.cdiv(B, tb),)

    itemsize_in = jnp.dtype(compute_dtype).itemsize
    itemsize_out = jnp.dtype(out_dtype).itemsize
    cost = pl.CostEstimate(
        flops=2 * B * (emb * n1 + n1 * n2),
        transcendentals=B,
        bytes_accessed=(B * emb * itemsize_in          # x read
                        + B * n2 * itemsize_out        # out write
                        + w1c.size * itemsize_in + w2c.size * itemsize_in
                        + b1f.size * 4 + b2f.size * 4),
    )

    out = pl.pallas_call(
        _triplet_mlp_kernel,
        out_shape=jax.ShapeDtypeStruct((B, n2), out_dtype),
        grid_spec=pl.GridSpec(
            grid=grid,
            in_specs=[
                pl.BlockSpec((tb, emb), lambda i: (i, 0)),    # x block (streamed)
                pl.BlockSpec((emb, n1), lambda i: (0, 0)),    # w1 (VMEM-resident)
                pl.BlockSpec((1, n1),   lambda i: (0, 0)),    # b1 (resident)
                pl.BlockSpec((n1, n2),  lambda i: (0, 0)),    # w2 (resident)
                pl.BlockSpec((1, n2),   lambda i: (0, 0)),    # b2 (resident)
            ],
            out_specs=pl.BlockSpec((tb, n2), lambda i: (i, 0)),  # direct (B,64) out
        ),
        compiler_params=pltpu.CompilerParams(
            dimension_semantics=("parallel",),       # megacore sharding on v7x
            vmem_limit_bytes=64 * 1024 * 1024,       # headroom for large tb on v5e
        ),
        cost_estimate=cost,
    )(xc, w1c, b1f, w2c, b2f)
    return out


def init_params(key):
    k1, k2, k3, k4 = jax.random.split(key, 4)
    # torch-Linear-like uniform init: U(-1/sqrt(fan_in), 1/sqrt(fan_in))
    lim1 = 1.0 / jnp.sqrt(EMB_DIM)
    lim2 = 1.0 / jnp.sqrt(TRIPLET_LAYER_SIZE1)
    w1 = jax.random.uniform(k1, (EMB_DIM, TRIPLET_LAYER_SIZE1), jnp.float32, -lim1, lim1)
    b1 = jax.random.uniform(k2, (1, TRIPLET_LAYER_SIZE1), jnp.float32, -lim1, lim1)
    w2 = jax.random.uniform(k3, (TRIPLET_LAYER_SIZE1, TRIPLET_LAYER_SIZE2), jnp.float32, -lim2, lim2)
    b2 = jax.random.uniform(k4, (1, TRIPLET_LAYER_SIZE2), jnp.float32, -lim2, lim2)
    return w1, b1, w2, b2


def _reference(x, w1, b1, w2, b2, compute_dtype):
    xc = x.astype(compute_dtype)
    w1c = w1.astype(compute_dtype)
    w2c = w2.astype(compute_dtype)
    h = jnp.dot(xc, w1c, preferred_element_type=jnp.float32) + b1
    h = jnp.maximum(h, 0.0)
    o = jnp.dot(h.astype(compute_dtype), w2c, preferred_element_type=jnp.float32) + b2
    o = jnp.maximum(o, 0.0)
    return o * jax.lax.rsqrt(jnp.sum(o * o, axis=1, keepdims=True) + _NORM_EPS)


if __name__ == "__main__":
    key = jax.random.PRNGKey(0)
    kx, kp = jax.random.split(key)
    batch = 8
    x = jax.random.normal(kx, (batch, EMB_DIM), jnp.float32)
    w1, b1, w2, b2 = init_params(kp)

    # 1) full-f32 compute + f32 output: tight check against plain-JAX reference
    out_f32 = triplet_forward(x, w1, b1, w2, b2,
                              compute_dtype=jnp.float32, out_dtype=jnp.float32)
    jax.block_until_ready(out_f32)
    ref_f32 = _reference(x, w1, b1, w2, b2, jnp.float32)
    assert out_f32.shape == (batch, TRIPLET_LAYER_SIZE2)
    assert jnp.allclose(out_f32, ref_f32, atol=5e-5, rtol=5e-5)

    # 2) default path: bf16 matmul inputs, bf16 normalized output
    out_bf16 = triplet_forward(x, w1, b1, w2, b2)
    jax.block_until_ready(out_bf16)
    out_bf16_f = out_bf16.astype(jnp.float32)
    ref_bf16 = _reference(x, w1, b1, w2, b2, jnp.bfloat16)
    assert out_bf16.shape == (batch, TRIPLET_LAYER_SIZE2)
    assert out_bf16.dtype == jnp.bfloat16
    assert jnp.allclose(out_bf16_f, ref_bf16, atol=2e-2, rtol=2e-2)
    assert jnp.allclose(out_bf16_f, ref_f32, atol=3e-2, rtol=3e-2)

    # 3) multi-step grid with a ragged last block (small shapes; exercises masking)
    xb = jax.random.normal(jax.random.PRNGKey(1), (100, EMB_DIM), jnp.float32)
    out_big = triplet_forward(xb, w1, b1, w2, b2, block_rows=32)
    jax.block_until_ready(out_big)
    ref_big = _reference(xb, w1, b1, w2, b2, jnp.bfloat16)
    assert out_big.shape == (100, TRIPLET_LAYER_SIZE2)
    assert jnp.allclose(out_big.astype(jnp.float32), ref_big, atol=2e-2, rtol=2e-2)

    print("KERNEL_OK")
</pallas_src>

<mosaic_0001>
module attributes {stable_mosaic.version = 11 : i64} {
  func.func @_triplet_mlp_kernel(%arg0: i32, %arg1: memref<16x32xf32, #tpu.memory_space<vmem>>, %arg2: memref<32x128xf32, #tpu.memory_space<vmem>>, %arg3: memref<1x128xf32, #tpu.memory_space<vmem>>, %arg4: memref<128x64xf32, #tpu.memory_space<vmem>>, %arg5: memref<1x64xf32, #tpu.memory_space<vmem>>, %arg6: memref<16x64xf32, #tpu.memory_space<vmem>>) attributes {dimension_semantics = [#tpu.dimension_semantics<parallel>], iteration_bounds = array<i64: 1>, scalar_prefetch = 0 : i64, scratch_operands = 0 : i64, tpu.core_type = #tpu.core_type<tc>, window_params = [{transform_indices = @transform_0, window_bounds = array<i64: 16, 32>}, {pipeline_mode = #tpu.pipeline_mode<synchronous>, transform_indices = @transform_1, window_bounds = array<i64: 32, 128>}, {pipeline_mode = #tpu.pipeline_mode<synchronous>, transform_indices = @transform_2, window_bounds = array<i64: 1, 128>}, {pipeline_mode = #tpu.pipeline_mode<synchronous>, transform_indices = @transform_3, window_bounds = array<i64: 128, 64>}, {pipeline_mode = #tpu.pipeline_mode<synchronous>, transform_indices = @transform_4, window_bounds = array<i64: 1, 64>}, {transform_indices = @transform_5, window_bounds = array<i64: 16, 64>}]} {
    %c0 = arith.constant 0 : index
    %c0_0 = arith.constant 0 : index
    %0 = vector.load %arg1[%c0, %c0_0] : memref<16x32xf32, #tpu.memory_space<vmem>>, vector<16x32xf32>
    %c0_1 = arith.constant 0 : index
    %c0_2 = arith.constant 0 : index
    %1 = vector.load %arg2[%c0_1, %c0_2] : memref<32x128xf32, #tpu.memory_space<vmem>>, vector<32x128xf32>
    %cst = arith.constant dense<0.000000e+00> : vector<16x128xf32>
    %2 = tpu.matmul %0, %1, %cst {dimension_numbers = #tpu.dot_dimension_numbers<[1], [0], [0], [1], [0, 0, 1, 1], [], []>} : vector<16x32xf32>, vector<32x128xf32>, vector<16x128xf32> -> vector<16x128xf32>
    %c0_3 = arith.constant 0 : index
    %c0_4 = arith.constant 0 : index
    %3 = vector.load %arg3[%c0_3, %c0_4] : memref<1x128xf32, #tpu.memory_space<vmem>>, vector<1x128xf32>
    %4 = vector.broadcast %3 : vector<1x128xf32> to vector<16x128xf32>
    %5 = arith.addf %2, %4 : vector<16x128xf32>
    %cst_5 = arith.constant 0.000000e+00 : f32
    %6 = vector.broadcast %cst_5 : f32 to vector<16x128xf32>
    %7 = arith.maximumf %5, %6 : vector<16x128xf32>
    %c0_6 = arith.constant 0 : index
    %c0_7 = arith.constant 0 : index
    %8 = vector.load %arg4[%c0_6, %c0_7] : memref<128x64xf32, #tpu.memory_space<vmem>>, vector<128x64xf32>
    %cst_8 = arith.constant dense<0.000000e+00> : vector<16x64xf32>
    %9 = tpu.matmul %7, %8, %cst_8 {dimension_numbers = #tpu.dot_dimension_numbers<[1], [0], [0], [1], [0, 0, 1, 1], [], []>} : vector<16x128xf32>, vector<128x64xf32>, vector<16x64xf32> -> vector<16x64xf32>
    %c0_9 = arith.constant 0 : index
    %c0_10 = arith.constant 0 : index
    %10 = vector.load %arg5[%c0_9, %c0_10] : memref<1x64xf32, #tpu.memory_space<vmem>>, vector<1x64xf32>
    %11 = vector.broadcast %10 : vector<1x64xf32> to vector<16x64xf32>
    %12 = arith.addf %9, %11 : vector<16x64xf32>
    %cst_11 = arith.constant 0.000000e+00 : f32
    %13 = vector.broadcast %cst_11 : f32 to vector<16x64xf32>
    %14 = arith.maximumf %12, %13 : vector<16x64xf32>
    %15 = arith.mulf %14, %14 : vector<16x64xf32>
    %cst_12 = arith.constant dense<0.000000e+00> : vector<16xf32>
    %16 = vector.multi_reduction <add>, %15, %cst_12 [1] : vector<16x64xf32> to vector<16xf32>
    %17 = vector.shape_cast %16 : vector<16xf32> to vector<16x1xf32>
    %cst_13 = arith.constant 9.99999996E-13 : f32
    %18 = vector.broadcast %cst_13 : f32 to vector<16x1xf32>
    %19 = arith.addf %17, %18 : vector<16x1xf32>
    %20 = math.rsqrt %19 : vector<16x1xf32>
    %21 = vector.broadcast %20 : vector<16x1xf32> to vector<16x64xf32>
    %22 = arith.mulf %14, %21 : vector<16x64xf32>
    %c0_14 = arith.constant 0 : index
    %c0_15 = arith.constant 0 : index
    %23 = vector.load %arg6[%c0_14, %c0_15] : memref<16x64xf32, #tpu.memory_space<vmem>>, vector<16x64xf32>
    tpu.vector_store %arg6[%c0_14, %c0_15], %22 {strides = array<i32>} : memref<16x64xf32, #tpu.memory_space<vmem>>, vector<16x64xf32>,
    return
  }
  func.func @transform_0(%arg0: i32) -> (i32, i32) {
    %c0_i32 = arith.constant 0 : i32
    %c0_i32_0 = arith.constant 0 : i32
    return %arg0, %c0_i32 : i32, i32
  }
  func.func @transform_1(%arg0: i32) -> (i32, i32) {
    %c0_i32 = arith.constant 0 : i32
    %c0_i32_0 = arith.constant 0 : i32
    %c0_i32_1 = arith.constant 0 : i32
    return %c0_i32, %c0_i32_0 : i32, i32
  }
  func.func @transform_2(%arg0: i32) -> (i32, i32) {
    %c0_i32 = arith.constant 0 : i32
    %c0_i32_0 = arith.constant 0 : i32
    %c0_i32_1 = arith.constant 0 : i32
    return %c0_i32, %c0_i32_0 : i32, i32
  }
  func.func @transform_3(%arg0: i32) -> (i32, i32) {
    %c0_i32 = arith.constant 0 : i32
    %c0_i32_0 = arith.constant 0 : i32
    %c0_i32_1 = arith.constant 0 : i32
    return %c0_i32, %c0_i32_0 : i32, i32
  }
  func.func @transform_4(%arg0: i32) -> (i32, i32) {
    %c0_i32 = arith.constant 0 : i32
    %c0_i32_0 = arith.constant 0 : i32
    %c0_i32_1 = arith.constant 0 : i32
    return %c0_i32, %c0_i32_0 : i32, i32
  }
  func.func @transform_5(%arg0: i32) -> (i32, i32) {
    %c0_i32 = arith.constant 0 : i32
    %c0_i32_0 = arith.constant 0 : i32
    return %arg0, %c0_i32 : i32, i32
  }
}

</mosaic_0001>

<llo_original>
// kernel: tpu_custom_call.1
$region0: #{tpu_custom_call.1}
  #allocation0 [shape = 'u32[]', space=smem, size = 0x4, offset = 0x4, fixed_abs, tag = 'smem constant byte address 0x4 - core index']
  #allocation1 [shape = 'u32[72,128]{1,0:T(1,128)}', space=vmem, size = 0x9000, scoped, tag = 'internal scratch']
  %s0 = inlined_call_operand.vmem [shape: f32[8,32], index: 0, kind: input, shape index: {}]
  %s1 = inlined_call_operand.vmem [shape: f32[32,128], index: 1, kind: input, shape index: {}]
  %s2 = inlined_call_operand.vmem [shape: f32[1,128], index: 2, kind: input, shape index: {}]
  %s3 = inlined_call_operand.vmem [shape: f32[128,64], index: 3, kind: input, shape index: {}]
  %s4 = inlined_call_operand.vmem [shape: f32[1,64], index: 4, kind: input, shape index: {}]
  %s5 = inlined_call_operand.hbm [shape: f32[8,64], index: 5, kind: output, shape index: {}]
  %s6 = sld [smem:[#allocation0]]
  $region30: #{tpu_custom_call.1} parent=0
    _
  %s8 = ssub.s32 1, %s6
  %s9 = scalar_select 0, %s8, %s6
  $region1: #{tpu_custom_call.1} parent=0
    #allocation2 [shape = 'u8[8192]{0}', space=vmem, size = 0x2000, scoped, tag = 'output window, operand 0, single buffered']
    #allocation3 [shape = 's32[1]{0}', space=sflag, size = 0x4, scoped, tag = 'scoped memory for tpu_custom_call.1']
    %10 = vsyncpa [#allocation3], 0
    // Predicated region
    $region2: #{tpu_custom_call.1} parent=1 // pred_check
      _
    $region3: #{tpu_custom_call.1} parent=1 // pred_check_branch
      %12 = sbr.rel (0) target = $region5
    $region4: #{tpu_custom_call.1} parent=1 // pred_region
      _
    $region5: #{tpu_custom_call.1} parent=1 // pred_fallthru
      _
    // Predicated region
    $region6: #{tpu_custom_call.1} parent=1 // pred_check
      _
    $region7: #{tpu_custom_call.1} parent=1 // pred_check_branch
      %14 = sbr.rel (0) target = $region9
    $region8: #{tpu_custom_call.1} parent=1 // pred_region
      _
    $region9: #{tpu_custom_call.1} parent=1 // pred_fallthru
      _
    // Predicated region
    $region10: #{tpu_custom_call.1} parent=1 // pred_check
      _
    $region11: #{tpu_custom_call.1} parent=1 // pred_check_branch
      %16 = sbr.rel (0) target = $region13
    $region12: #{tpu_custom_call.1} parent=1 // pred_region
      _
    $region13: #{tpu_custom_call.1} parent=1 // pred_fallthru
      _
    // Predicated region
    $region14: #{tpu_custom_call.1} parent=1 // pred_check
      _
    $region15: #{tpu_custom_call.1} parent=1 // pred_check_branch
      %18 = sbr.rel (0) target = $region17
    $region16: #{tpu_custom_call.1} parent=1 // pred_region
      _
    $region17: #{tpu_custom_call.1} parent=1 // pred_fallthru
      _
    // Predicated region
    $region18: #{tpu_custom_call.1} parent=1 // pred_check
      _
    $region19: #{tpu_custom_call.1} parent=1 // pred_check_branch
      %20 = sbr.rel (0) target = $region21
    $region20: #{tpu_custom_call.1} parent=1 // pred_region
      _
    $region21: #{tpu_custom_call.1} parent=1 // pred_fallthru
      _
    %v21 = vld [vmem:[%s0] sm:$0xff]
    %v22 = vld [vmem:[%s0 + $0x8] sm:$0xff]
    %v23 = vld [vmem:[%s1] sm:$0xff]
    %v24 = vld [vmem:[%s1 + $0x8] sm:$0xff]
    %v25 = vld [vmem:[%s1 + $0x10] sm:$0xff]
    %v26 = vld [vmem:[%s1 + $0x18] sm:$0xff]
    %v27 = vld [vmem:[%s2] sm:$0x1]
    %v29 = vperm.slane %v27, 0
    %vm31 = vcmask 261120
    %v33 = vsel %vm31, %v21, 0
    %v36 = vsel %vm31, %v22, 0
    %38 = vmatpush.msra.mxu0 0.0
    %39 = vmatpush.msra.mxu0 0.0
    %40 = vmatpush.msra.mxu0 0.0
    %41 = vmatpush.msra.mxu0 0.0
    %42 = vmatpush.msra.mxu0 0.0
    %43 = vmatpush.msra.mxu0 0.0
    %44 = vmatpush.msra.mxu0 0.0
    %45 = vmatpush.msra.mxu0 0.0
    %46 = vmatpush.msra.mxu0 0.0
    %47 = vmatpush.msra.mxu0 0.0
    %48 = vmatpush.msra.mxu0 0.0
    %49 = vmatpush.msra.mxu0 0.0
    %50 = vmatpush.msra.mxu0 %v26
    %51 = vmatpush.msra.mxu0 %v25
    %52 = vmatpush.msra.mxu0 %v24
    %53 = vmatpush.msra.mxu0 %v23
    %54 = vmatmul.f32.gmra.mxu0 %v33
    %v55 = vpop.f32.mrf.mxu0
    %v56 = vadd.f32 %v29, %v55
    %57 = vmatmul.f32.gmra.mxu0 %v36
    %v58 = vpop.f32.mrf.mxu0
    %v59 = vadd.f32 %v29, %v58
    %60 = vdwg.mxu0
    %v61 = vmax.f32 %v56, 0.0
    %v62 = vmax.f32 %v59, 0.0
    %v63 = vld [vmem:[%s3] sm:$0xff]
    %v64 = vld [vmem:[%s3 + $0x8] sm:$0xff]
    %v65 = vld [vmem:[%s3 + $0x10] sm:$0xff]
    %v66 = vld [vmem:[%s3 + $0x18] sm:$0xff]
    %v67 = vld [vmem:[%s3 + $0x20] sm:$0xff]
    %v68 = vld [vmem:[%s3 + $0x28] sm:$0xff]
    %v69 = vld [vmem:[%s3 + $0x30] sm:$0xff]
    %v70 = vld [vmem:[%s3 + $0x38] sm:$0xff]
    %v71 = vld [vmem:[%s3 + $0x40] sm:$0xff]
    %v72 = vld [vmem:[%s3 + $0x48] sm:$0xff]
    %v73 = vld [vmem:[%s3 + $0x50] sm:$0xff]
    %v74 = vld [vmem:[%s3 + $0x58] sm:$0xff]
    %v75 = vld [vmem:[%s3 + $0x60] sm:$0xff]
    %v76 = vld [vmem:[%s3 + $0x68] sm:$0xff]
    %v77 = vld [vmem:[%s3 + $0x70] sm:$0xff]
    %v78 = vld [vmem:[%s3 + $0x78] sm:$0xff]
    %v79 = vld [vmem:[%s4] sm:$0x1]
    %v81 = vperm.slane %v79, 0
    %83 = vmatpush.msra.mxu0 %v78
    %84 = vmatpush.msra.mxu0 %v77
    %85 = vmatpush.msra.mxu0 %v76
    %86 = vmatpush.msra.mxu0 %v75
    %87 = vmatpush.msra.mxu0 %v74
    %88 = vmatpush.msra.mxu0 %v73
    %89 = vmatpush.msra.mxu0 %v72
    %90 = vmatpush.msra.mxu0 %v71
    %91 = vmatpush.msra.mxu0 %v70
    %92 = vmatpush.msra.mxu0 %v69
    %93 = vmatpush.msra.mxu0 %v68
    %94 = vmatpush.msra.mxu0 %v67
    %95 = vmatpush.msra.mxu0 %v66
    %96 = vmatpush.msra.mxu0 %v65
    %97 = vmatpush.msra.mxu0 %v64
    %98 = vmatpush.msra.mxu0 %v63
    %99 = vmatmul.f32.gmra.mxu0 %v61
    %v100 = vpop.f32.mrf.mxu0
    %v101 = vadd.f32 %v81, %v100
    %102 = vmatmul.f32.gmra.mxu0 %v62
    %v103 = vpop.f32.mrf.mxu0
    %v104 = vadd.f32 %v81, %v103
    %105 = vdwg.mxu0
    %v106 = vmax.f32 %v101, 0.0
    %v107 = vmax.f32 %v104, 0.0
    %v108 = vmul.f32 %v106, %v106
    %v109 = vmul.f32 %v107, %v107
    %vm110 = vcmask 523264
    %v111 = vsel %vm110, %v108, 0.0
    %112 = vadd.xlane.f32.xlu0 %v111
    %v113 = vpop.xlane.xlu0 %112
    %v114 = vsel %vm110, %v109, 0.0
    %115 = vadd.xlane.f32.xlu0 %v114
    %v116 = vpop.xlane.xlu0 %115
    %v117 = vadd.f32 %v113, 1e-12
    %v118 = vadd.f32 %v116, 1e-12
    %v119 = vrsqrt.pop %v117
    %v120 = vmul.f32 %v119, %v117
    %v121 = vmul.f32 %v120, %v119
    %v122 = vmul.f32 0.5, %v121
    %v123 = vsub.f32 1.5, %v122
    %v124 = vmul.f32 %v119, %v123
    %vm125 = vweird.f32 %v117
    %vm126 = vweird.f32 %v119
    %vm127 = vmor %vm125, %vm126
    %v128 = vsel %vm127, %v119, %v124
    %v129 = vrsqrt.pop %v118
    %v130 = vmul.f32 %v129, %v118
    %v131 = vmul.f32 %v130, %v129
    %v132 = vmul.f32 0.5, %v131
    %v133 = vsub.f32 1.5, %v132
    %v134 = vmul.f32 %v129, %v133
    %vm135 = vweird.f32 %v118
    %vm136 = vweird.f32 %v129
    %vm137 = vmor %vm135, %vm136
    %v138 = vsel %vm137, %v129, %v134
    %v139 = vmul.f32 %v106, %v128
    %v140 = vmul.f32 %v107, %v138
    %141 = vst.msk [vmem:[#allocation2] sm:$0xff] %vm110, %v139
    %142 = vst.msk [vmem:[#allocation2 + $0x8] sm:$0xff] %vm110, %v140
    // Predicated region
    $region22: #{tpu_custom_call.1} parent=1 // pred_check
      _
    $region23: #{tpu_custom_call.1} parent=1 // pred_check_branch
      %144 = sbr.rel (0) target = $region25
    $region24: #{tpu_custom_call.1} parent=1 // pred_region
      %146 = vsyncadd [#allocation3], 128
      %s147 = sshll.u32 [#allocation2], 4
      %s148 = int_to_ptr.vmem [resolvable:$true] %s147
      %s149 = sshll.u32 %s5, 4
      %s150 = int_to_ptr.hbm [resolvable:$true] %s149
      %155 = dma.vmem_to_hbm [thread:$0]  %s148, 128, %s150, [#allocation3], 128, 128, 8
    $region25: #{tpu_custom_call.1} parent=1 // pred_fallthru
      _
    // Predicated region
    $region26: #{tpu_custom_call.1} parent=1 // pred_check
      _
    $region27: #{tpu_custom_call.1} parent=1 // pred_check_branch
      %157 = sbr.rel (0) target = $region29
    $region28: #{tpu_custom_call.1} parent=1 // pred_region
      %159 = dma.done [#allocation3], 256
    $region29: #{tpu_custom_call.1} parent=1 // pred_fallthru
      _
    %160 = vsyncpa [#allocation3], 1

</llo_original>
